<compile_context>
chip_gen: v7x
topology: tpu7x:2x2x1
jax: 0.10.0
libtpu: 0.0.40
codegen_flags: <defaults>
</compile_context>

<pallas_src>
import jax
import jax.numpy as jnp
from jax.experimental import pallas as pl
from jax.experimental.pallas import tpu as pltpu

# ---- "config" (small, consistent with the module) ----
VOCAB_SIZE = 50
EMBEDDING_SIZE = 32
NUM_FILTERS = 8
FILTER_SIZES = (2, 3, 4)
NUM_LABELS = 5
SEQ_LEN = 16
BATCH = 2

KMAX = max(FILTER_SIZES)
KK = KMAX * EMBEDDING_SIZE          # im2col contraction dim (4*32 = 128)
NP = 128                            # lane-padded fused feature / logit width

assert KK == 128, "im2col contraction must be one full MXU lane group"
assert NUM_FILTERS * len(FILTER_SIZES) <= NP
assert NUM_LABELS <= NP


def textcnn_kernel(slab_ref, wconv_ref, bconv_ref, mask_ref, fcw_ref, fcb_ref,
                   out_ref):
    """One batch block: fused conv matmul over the lane-dense im2col slab
    -> +bias -> relu -> resident-mask multiply -> max-pool over time -> f32 FC.
    Every VMEM tensor is 128 lanes wide, so all stores are unmasked vst's."""
    blk_b, tp, kk = slab_ref.shape

    # Batch folded into M (free reshape: leading-dim merge, (8,128) tiles kept).
    x = slab_ref[...].reshape(blk_b * tp, kk)

    # One MXU push for all conv branches (K = kmax*E = 128, N = 128).
    conv = jnp.dot(x, wconv_ref[...],
                   preferred_element_type=jnp.float32)              # (M, NP) f32
    conv = conv.reshape(blk_b, tp, NP) + bconv_ref[...]              # + bias
    # relu, then zero windows that run past L-k for their branch (mask is
    # precomputed in the wrapper and resident; relu output >= 0 so zeroing
    # invalid windows leaves the time-max intact).
    conv = jnp.maximum(conv, 0.0) * mask_ref[...]

    # Max-pool over the full (valid) time axis -> fused features.
    feat = jnp.max(conv, axis=1)                                     # (blk_b, NP) f32

    # Classifier in f32 (nn.Dropout is identity in eval mode).
    logits = jnp.dot(feat, fcw_ref[...],
                     preferred_element_type=jnp.float32) + fcb_ref[...]
    out_ref[...] = logits


def init_params(key):
    ks = jax.random.split(key, 10)
    scale = 0.1
    params = {
        'embedding': scale * jax.random.normal(
            ks[0], (VOCAB_SIZE, EMBEDDING_SIZE), jnp.float32),
        'fc_w': scale * jax.random.normal(
            ks[1], (NUM_FILTERS * len(FILTER_SIZES), NUM_LABELS), jnp.float32),
        'fc_b': scale * jax.random.normal(ks[2], (1, NUM_LABELS), jnp.float32),
    }
    for i, k in enumerate(FILTER_SIZES):
        params[f'conv{k}_w'] = scale * jax.random.normal(
            ks[3 + 2 * i], (k, EMBEDDING_SIZE, NUM_FILTERS), jnp.float32)
        params[f'conv{k}_b'] = scale * jax.random.normal(
            ks[4 + 2 * i], (1, NUM_FILTERS), jnp.float32)
    return params


def pack_params(params, compute_dtype):
    """Pack all conv weights into one (kmax*E, 128) matrix (im2col layout, one
    branch per F-column slot), zero-pad the fc weight/bias to 128 lanes.
    Conv side is cast to the compute dtype; the FC stays in f32."""
    E, F, nk = EMBEDDING_SIZE, NUM_FILTERS, len(FILTER_SIZES)
    wconv = jnp.zeros((KK, NP), jnp.float32)
    bconv = jnp.zeros((1, NP), jnp.float32)
    for bi, k in enumerate(FILTER_SIZES):
        w = params[f'conv{k}_w'].reshape(k * E, F)      # rows ordered (tap, e)
        wconv = wconv.at[:k * E, bi * F:(bi + 1) * F].set(w)
        bconv = bconv.at[:, bi * F:(bi + 1) * F].set(params[f'conv{k}_b'])
    fcw = jnp.zeros((NP, NP), jnp.float32)
    fcw = fcw.at[:F * nk, :NUM_LABELS].set(params['fc_w'])
    fcb = jnp.zeros((1, NP), jnp.float32)
    fcb = fcb.at[:, :NUM_LABELS].set(params['fc_b'])
    return wconv.astype(compute_dtype), bconv, fcw, fcb


def build_mask(seq_len, tp):
    """(tp, NP) f32 mask: 1 where window t is valid for the branch owning that
    feature column, else 0.  Padded columns >= F*len(FILTER_SIZES) have zero
    conv weights / fc rows, so their mask value is irrelevant."""
    t = jnp.arange(tp)[:, None]                               # (tp, 1)
    branch = jnp.arange(NP)[None, :] // NUM_FILTERS           # (1, NP)
    limit = jnp.full((1, NP), seq_len - FILTER_SIZES[0], jnp.int32)
    for bi, k in enumerate(FILTER_SIZES):
        limit = jnp.where(branch == bi, seq_len - k, limit)
    return (t <= limit).astype(jnp.float32)


def _pick_block_b(B):
    """Batch rows per grid step.  Large blocks amortize the ~0.35 us/step grid
    overhead (and are the only MXU-utilization lever since K=N=128 are fixed);
    when B > 8 we keep >= 2 grid steps so the "parallel" batch axis can shard
    across both TensorCores on v7x (a no-op on single-TC v5e/v6e)."""
    if B <= 8:
        return B
    cap = min(128, B // 2)
    for cand in range(cap, 0, -1):
        if B % cand == 0:
            return cand
    return 1


def textcnn_forward(input_ids, params, compute_dtype=jnp.bfloat16):
    B, L = input_ids.shape
    kmin = min(FILTER_SIZES)
    t_max = L - kmin + 1                 # widest branch's window count
    tp = -(-t_max // 8) * 8              # sublane-aligned window count

    # --- embedding gather fused with im2col in the wrapper (one XLA gather) ---
    # slab[b, t, j*E + e] = embedding[input_ids[b, t+j], e]  (lane-dense, 128 wide)
    # Out-of-range taps are clamped to token L-1; they only feed zero weight
    # columns or masked windows, so they never affect the result.
    # TODO(synk): for large B*L, fuse this gather into the kernel instead
    # (scalar-prefetch input_ids into SMEM + resident 50x32 table in VMEM) to
    # drop the (B*tp, 128) HBM round trip.
    pos = jnp.minimum(jnp.arange(tp)[:, None] + jnp.arange(KMAX)[None, :], L - 1)
    win_ids = input_ids[:, pos]                                   # (B, tp, KMAX)
    slab = params['embedding'][win_ids].reshape(B, tp, KK).astype(compute_dtype)

    wconv, bconv, fcw, fcb = pack_params(params, compute_dtype)
    mask = build_mask(L, tp)

    block_b = _pick_block_b(B)
    assert B % block_b == 0
    grid = (B // block_b,)

    out = pl.pallas_call(
        textcnn_kernel,
        out_shape=jax.ShapeDtypeStruct((B, NP), jnp.float32),
        grid=grid,
        in_specs=[
            pl.BlockSpec((block_b, tp, KK), lambda i: (i, 0, 0)),  # lane-dense slab tile
            pl.BlockSpec((KK, NP), lambda i: (0, 0)),   # packed conv weight (resident)
            pl.BlockSpec((1, NP), lambda i: (0, 0)),    # packed conv bias   (resident)
            pl.BlockSpec((tp, NP), lambda i: (0, 0)),   # valid-window mask  (resident)
            pl.BlockSpec((NP, NP), lambda i: (0, 0)),   # fc weight, f32     (resident)
            pl.BlockSpec((1, NP), lambda i: (0, 0)),    # fc bias            (resident)
        ],
        out_specs=pl.BlockSpec((block_b, NP), lambda i: (i, 0)),   # lane-dense logits
        compiler_params=pltpu.CompilerParams(
            # Batch axis shards across TensorCores on v7x megacore.
            dimension_semantics=("parallel",),
            # Explicit scoped-VMEM budget: raises v5e's 16 MiB default; safe on
            # every generation (v7x physical VMEM is 64 MiB).
            vmem_limit_bytes=32 * 1024 * 1024),
    )(slab, wconv, bconv, mask, fcw, fcb)

    return out[:, :NUM_LABELS]


def textcnn_reference(input_ids, params):
    """Pure-JAX f32 reference matching the PyTorch forward (eval mode)."""
    emb = params['embedding'][input_ids]                 # (B, L, E)
    B, L, E = emb.shape
    feats = []
    for k in FILTER_SIZES:
        T = L - k + 1
        w = params[f'conv{k}_w']                         # (k, E, F)
        acc = jnp.zeros((B, T, NUM_FILTERS), jnp.float32)
        for j in range(k):
            acc = acc + jnp.einsum('bte,ef->btf', emb[:, j:j + T, :], w[j])
        acc = jnp.maximum(acc + params[f'conv{k}_b'], 0.0)
        feats.append(jnp.max(acc, axis=1))
    feat = jnp.concatenate(feats, axis=1)
    return feat @ params['fc_w'] + params['fc_b']


if __name__ == "__main__":
    key = jax.random.PRNGKey(0)
    k_params, k_ids = jax.random.split(key)
    params = init_params(k_params)

    # batch=2: single-block path; batch=16: grid of 2 blocks of 8;
    # batch=256: grid of 2 blocks of 128 (the large-M path from the review).
    for batch in (BATCH, 16, 256):
        ids_key = jax.random.fold_in(k_ids, batch)
        input_ids = jax.random.randint(ids_key, (batch, SEQ_LEN), 0, VOCAB_SIZE,
                                       dtype=jnp.int32)
        ref = textcnn_reference(input_ids, params)

        out_f32 = jax.block_until_ready(
            textcnn_forward(input_ids, params, compute_dtype=jnp.float32))
        assert out_f32.shape == (batch, NUM_LABELS)
        assert jnp.allclose(out_f32, ref, atol=1e-4, rtol=1e-4), \
            f"f32 kernel mismatch vs reference (batch={batch})"

        out_bf16 = jax.block_until_ready(
            textcnn_forward(input_ids, params, compute_dtype=jnp.bfloat16))
        assert out_bf16.shape == (batch, NUM_LABELS)
        # bf16 conv inputs / f32 accumulation / f32 FC: bf16-level tolerance.
        assert jnp.allclose(out_bf16, ref, atol=2e-2, rtol=2e-2), \
            f"bf16 kernel mismatch vs reference (batch={batch})"

    print("KERNEL_OK")
</pallas_src>

<mosaic_0001>
module attributes {stable_mosaic.version = 11 : i64} {
  func.func @textcnn_kernel(%arg0: i32, %arg1: memref<2x16x128xf32, #tpu.memory_space<vmem>>, %arg2: memref<128x128xf32, #tpu.memory_space<vmem>>, %arg3: memref<1x128xf32, #tpu.memory_space<vmem>>, %arg4: memref<16x128xf32, #tpu.memory_space<vmem>>, %arg5: memref<128x128xf32, #tpu.memory_space<vmem>>, %arg6: memref<1x128xf32, #tpu.memory_space<vmem>>, %arg7: memref<2x128xf32, #tpu.memory_space<vmem>>) attributes {dimension_semantics = [#tpu.dimension_semantics<parallel>], iteration_bounds = array<i64: 1>, scalar_prefetch = 0 : i64, scratch_operands = 0 : i64, tpu.core_type = #tpu.core_type<tc>, window_params = [{transform_indices = @transform_0, window_bounds = array<i64: 2, 16, 128>}, {pipeline_mode = #tpu.pipeline_mode<synchronous>, transform_indices = @transform_1, window_bounds = array<i64: 128, 128>}, {pipeline_mode = #tpu.pipeline_mode<synchronous>, transform_indices = @transform_2, window_bounds = array<i64: 1, 128>}, {pipeline_mode = #tpu.pipeline_mode<synchronous>, transform_indices = @transform_3, window_bounds = array<i64: 16, 128>}, {pipeline_mode = #tpu.pipeline_mode<synchronous>, transform_indices = @transform_4, window_bounds = array<i64: 128, 128>}, {pipeline_mode = #tpu.pipeline_mode<synchronous>, transform_indices = @transform_5, window_bounds = array<i64: 1, 128>}, {transform_indices = @transform_6, window_bounds = array<i64: 2, 128>}]} {
    %c0 = arith.constant 0 : index
    %c0_0 = arith.constant 0 : index
    %c0_1 = arith.constant 0 : index
    %0 = vector.load %arg1[%c0, %c0_0, %c0_1] : memref<2x16x128xf32, #tpu.memory_space<vmem>>, vector<2x16x128xf32>
    %1 = vector.shape_cast %0 : vector<2x16x128xf32> to vector<32x128xf32>
    %c0_2 = arith.constant 0 : index
    %c0_3 = arith.constant 0 : index
    %2 = vector.load %arg2[%c0_2, %c0_3] : memref<128x128xf32, #tpu.memory_space<vmem>>, vector<128x128xf32>
    %cst = arith.constant dense<0.000000e+00> : vector<32x128xf32>
    %3 = tpu.matmul %1, %2, %cst {dimension_numbers = #tpu.dot_dimension_numbers<[1], [0], [0], [1], [0, 0, 1, 1], [], []>} : vector<32x128xf32>, vector<128x128xf32>, vector<32x128xf32> -> vector<32x128xf32>
    %4 = vector.shape_cast %3 : vector<32x128xf32> to vector<2x16x128xf32>
    %c0_4 = arith.constant 0 : index
    %c0_5 = arith.constant 0 : index
    %5 = vector.load %arg3[%c0_4, %c0_5] : memref<1x128xf32, #tpu.memory_space<vmem>>, vector<1x128xf32>
    %6 = vector.shape_cast %5 : vector<1x128xf32> to vector<1x1x128xf32>
    %7 = vector.broadcast %6 : vector<1x1x128xf32> to vector<2x16x128xf32>
    %8 = arith.addf %4, %7 : vector<2x16x128xf32>
    %cst_6 = arith.constant 0.000000e+00 : f32
    %9 = vector.broadcast %cst_6 : f32 to vector<2x16x128xf32>
    %10 = arith.maximumf %8, %9 : vector<2x16x128xf32>
    %c0_7 = arith.constant 0 : index
    %c0_8 = arith.constant 0 : index
    %11 = vector.load %arg4[%c0_7, %c0_8] : memref<16x128xf32, #tpu.memory_space<vmem>>, vector<16x128xf32>
    %12 = vector.shape_cast %11 : vector<16x128xf32> to vector<1x16x128xf32>
    %13 = vector.broadcast %12 : vector<1x16x128xf32> to vector<2x16x128xf32>
    %14 = arith.mulf %10, %13 : vector<2x16x128xf32>
    %cst_9 = arith.constant dense<0xFF800000> : vector<2x128xf32>
    %15 = vector.multi_reduction <maximumf>, %14, %cst_9 [1] : vector<2x16x128xf32> to vector<2x128xf32>
    %c0_10 = arith.constant 0 : index
    %c0_11 = arith.constant 0 : index
    %16 = vector.load %arg5[%c0_10, %c0_11] : memref<128x128xf32, #tpu.memory_space<vmem>>, vector<128x128xf32>
    %cst_12 = arith.constant dense<0.000000e+00> : vector<2x128xf32>
    %17 = tpu.matmul %15, %16, %cst_12 {dimension_numbers = #tpu.dot_dimension_numbers<[1], [0], [0], [1], [0, 0, 1, 1], [], []>} : vector<2x128xf32>, vector<128x128xf32>, vector<2x128xf32> -> vector<2x128xf32>
    %c0_13 = arith.constant 0 : index
    %c0_14 = arith.constant 0 : index
    %18 = vector.load %arg6[%c0_13, %c0_14] : memref<1x128xf32, #tpu.memory_space<vmem>>, vector<1x128xf32>
    %19 = vector.broadcast %18 : vector<1x128xf32> to vector<2x128xf32>
    %20 = arith.addf %17, %19 : vector<2x128xf32>
    %c0_15 = arith.constant 0 : index
    %c0_16 = arith.constant 0 : index
    %21 = vector.load %arg7[%c0_15, %c0_16] : memref<2x128xf32, #tpu.memory_space<vmem>>, vector<2x128xf32>
    tpu.vector_store %arg7[%c0_15, %c0_16], %20 {strides = array<i32>} : memref<2x128xf32, #tpu.memory_space<vmem>>, vector<2x128xf32>,
    return
  }
  func.func @transform_0(%arg0: i32) -> (i32, i32, i32) {
    %c0_i32 = arith.constant 0 : i32
    %c0_i32_0 = arith.constant 0 : i32
    %c0_i32_1 = arith.constant 0 : i32
    return %arg0, %c0_i32, %c0_i32_0 : i32, i32, i32
  }
  func.func @transform_1(%arg0: i32) -> (i32, i32) {
    %c0_i32 = arith.constant 0 : i32
    %c0_i32_0 = arith.constant 0 : i32
    %c0_i32_1 = arith.constant 0 : i32
    return %c0_i32, %c0_i32_0 : i32, i32
  }
  func.func @transform_2(%arg0: i32) -> (i32, i32) {
    %c0_i32 = arith.constant 0 : i32
    %c0_i32_0 = arith.constant 0 : i32
    %c0_i32_1 = arith.constant 0 : i32
    return %c0_i32, %c0_i32_0 : i32, i32
  }
  func.func @transform_3(%arg0: i32) -> (i32, i32) {
    %c0_i32 = arith.constant 0 : i32
    %c0_i32_0 = arith.constant 0 : i32
    %c0_i32_1 = arith.constant 0 : i32
    return %c0_i32, %c0_i32_0 : i32, i32
  }
  func.func @transform_4(%arg0: i32) -> (i32, i32) {
    %c0_i32 = arith.constant 0 : i32
    %c0_i32_0 = arith.constant 0 : i32
    %c0_i32_1 = arith.constant 0 : i32
    return %c0_i32, %c0_i32_0 : i32, i32
  }
  func.func @transform_5(%arg0: i32) -> (i32, i32) {
    %c0_i32 = arith.constant 0 : i32
    %c0_i32_0 = arith.constant 0 : i32
    %c0_i32_1 = arith.constant 0 : i32
    return %c0_i32, %c0_i32_0 : i32, i32
  }
  func.func @transform_6(%arg0: i32) -> (i32, i32) {
    %c0_i32 = arith.constant 0 : i32
    %c0_i32_0 = arith.constant 0 : i32
    return %arg0, %c0_i32 : i32, i32
  }
}

</mosaic_0001>

<llo_original>
// kernel: tpu_custom_call.1
$region0: #{tpu_custom_call.1}
  #allocation0 [shape = 'u32[]', space=smem, size = 0x4, offset = 0x4, fixed_abs, tag = 'smem constant byte address 0x4 - core index']
  #allocation1 [shape = 'u32[144,128]{1,0:T(1,128)}', space=vmem, size = 0x12000, scoped, tag = 'internal scratch']
  %s0 = inlined_call_operand.hbm [shape: f32[2,16,128], index: 0, kind: input, shape index: {}]
  %s1 = inlined_call_operand.hbm [shape: f32[128,128], index: 1, kind: input, shape index: {}]
  %s2 = inlined_call_operand.vmem [shape: f32[1,128], index: 2, kind: input, shape index: {}]
  %s3 = inlined_call_operand.hbm [shape: f32[16,128], index: 3, kind: input, shape index: {}]
  %s4 = inlined_call_operand.hbm [shape: f32[128,128], index: 4, kind: input, shape index: {}]
  %s5 = inlined_call_operand.vmem [shape: f32[1,128], index: 5, kind: input, shape index: {}]
  %s6 = inlined_call_operand.hbm [shape: f32[2,128], index: 6, kind: output, shape index: {}]
  %s7 = sld [smem:[#allocation0]]
  $region50: #{tpu_custom_call.1} parent=0
    _
  %s9 = ssub.s32 1, %s7
  %s10 = scalar_select 0, %s9, %s7
  $region1: #{tpu_custom_call.1} parent=0
    #allocation2 [shape = 'u8[16384]{0}', space=vmem, size = 0x4000, scoped, tag = 'input window, operand 0, single buffered']
    #allocation3 [shape = 's32[1]{0}', space=sflag, size = 0x4, scoped, tag = 'scoped memory for tpu_custom_call.1']
    #allocation4 [shape = 's32[1]{0}', space=sflag, size = 0x4, scoped, tag = 'scoped memory for tpu_custom_call.1']
    #allocation5 [shape = 'u8[65536]{0}', space=vmem, size = 0x10000, scoped, tag = 'input window, operand 1, single buffered']
    #allocation6 [shape = 's32[1]{0}', space=sflag, size = 0x4, scoped, tag = 'scoped memory for tpu_custom_call.1']
    #allocation7 [shape = 'u8[8192]{0}', space=vmem, size = 0x2000, scoped, tag = 'input window, operand 3, single buffered']
    #allocation8 [shape = 'u8[65536]{0}', space=vmem, size = 0x10000, scoped, tag = 'input window, operand 4, single buffered']
    #allocation9 [shape = 's32[1]{0}', space=sflag, size = 0x4, scoped, tag = 'scoped memory for tpu_custom_call.1']
    #allocation10 [shape = 'u8[1024]{0}', space=vmem, size = 0x400, scoped, tag = 'output window, operand 0, single buffered']
    %11 = vsyncpa [#allocation3], 0
    %12 = vsyncpa [#allocation6], 0
    %13 = vsyncpa [#allocation9], 0
    %14 = vsyncpa [#allocation4], 0
    // Predicated region
    $region2: #{tpu_custom_call.1} parent=1 // pred_check
      _
    $region3: #{tpu_custom_call.1} parent=1 // pred_check_branch
      %16 = sbr.rel (0) target = $region5
    $region4: #{tpu_custom_call.1} parent=1 // pred_region
      %s18 = ssub.s32 512, 512
      %19 = vsyncadd [#allocation3], %s18
      %s20 = sshll.u32 [#allocation2], 4
      %s21 = int_to_ptr.vmem [resolvable:$true] %s20
      %26 = dma.hbm_to_vmem [thread:$0]  %s0, 512, %s21, [#allocation3], 128, 128, 8
    $region5: #{tpu_custom_call.1} parent=1 // pred_fallthru
      _
    // Predicated region
    $region6: #{tpu_custom_call.1} parent=1 // pred_check
      _
    $region7: #{tpu_custom_call.1} parent=1 // pred_check_branch
      %28 = sbr.rel (0) target = $region9
    $region8: #{tpu_custom_call.1} parent=1 // pred_region
      %s30 = ssub.s32 2048, 2048
      %31 = vsyncadd [#allocation6], %s30
      %s32 = sshll.u32 [#allocation5], 4
      %s33 = int_to_ptr.vmem [resolvable:$true] %s32
      %38 = dma.hbm_to_vmem [thread:$0]  %s1, 2048, %s33, [#allocation6], 128, 128, 8
    $region9: #{tpu_custom_call.1} parent=1 // pred_fallthru
      _
    // Predicated region
    $region10: #{tpu_custom_call.1} parent=1 // pred_check
      _
    $region11: #{tpu_custom_call.1} parent=1 // pred_check_branch
      %40 = sbr.rel (0) target = $region13
    $region12: #{tpu_custom_call.1} parent=1 // pred_region
      _
    $region13: #{tpu_custom_call.1} parent=1 // pred_fallthru
      _
    // Predicated region
    $region14: #{tpu_custom_call.1} parent=1 // pred_check
      _
    $region15: #{tpu_custom_call.1} parent=1 // pred_check_branch
      %42 = sbr.rel (0) target = $region17
    $region16: #{tpu_custom_call.1} parent=1 // pred_region
      %s44 = ssub.s32 256, 256
      %45 = vsyncadd [#allocation6], %s44
      %s46 = sshll.u32 [#allocation7], 4
      %s47 = int_to_ptr.vmem [resolvable:$true] %s46
      %52 = dma.hbm_to_vmem [thread:$0]  %s3, 256, %s47, [#allocation6], 128, 128, 8
    $region17: #{tpu_custom_call.1} parent=1 // pred_fallthru
      _
    // Predicated region
    $region18: #{tpu_custom_call.1} parent=1 // pred_check
      _
    $region19: #{tpu_custom_call.1} parent=1 // pred_check_branch
      %54 = sbr.rel (0) target = $region21
    $region20: #{tpu_custom_call.1} parent=1 // pred_region
      %s56 = ssub.s32 2048, 2048
      %57 = vsyncadd [#allocation9], %s56
      %s58 = sshll.u32 [#allocation8], 4
      %s59 = int_to_ptr.vmem [resolvable:$true] %s58
      %64 = dma.hbm_to_vmem [thread:$0]  %s4, 2048, %s59, [#allocation9], 128, 128, 8
    $region21: #{tpu_custom_call.1} parent=1 // pred_fallthru
      _
    // Predicated region
    $region22: #{tpu_custom_call.1} parent=1 // pred_check
      _
    $region23: #{tpu_custom_call.1} parent=1 // pred_check_branch
      %66 = sbr.rel (0) target = $region25
    $region24: #{tpu_custom_call.1} parent=1 // pred_region
      _
    $region25: #{tpu_custom_call.1} parent=1 // pred_fallthru
      _
    // Predicated region
    $region26: #{tpu_custom_call.1} parent=1 // pred_check
      _
    $region27: #{tpu_custom_call.1} parent=1 // pred_check_branch
      %68 = sbr.rel (0) target = $region29
    $region28: #{tpu_custom_call.1} parent=1 // pred_region
      %69 = dma.done [#allocation3], 512
    $region29: #{tpu_custom_call.1} parent=1 // pred_fallthru
      _
    // Predicated region
    $region30: #{tpu_custom_call.1} parent=1 // pred_check
      _
    $region31: #{tpu_custom_call.1} parent=1 // pred_check_branch
      %71 = sbr.rel (0) target = $region33
    $region32: #{tpu_custom_call.1} parent=1 // pred_region
      %72 = dma.done [#allocation6], 2048
    $region33: #{tpu_custom_call.1} parent=1 // pred_fallthru
      _
    // Predicated region
    $region34: #{tpu_custom_call.1} parent=1 // pred_check
      _
    $region35: #{tpu_custom_call.1} parent=1 // pred_check_branch
      %74 = sbr.rel (0) target = $region37
    $region36: #{tpu_custom_call.1} parent=1 // pred_region
      %75 = dma.done [#allocation6], 256
    $region37: #{tpu_custom_call.1} parent=1 // pred_fallthru
      _
    // Predicated region
    $region38: #{tpu_custom_call.1} parent=1 // pred_check
      _
    $region39: #{tpu_custom_call.1} parent=1 // pred_check_branch
      %77 = sbr.rel (0) target = $region41
    $region40: #{tpu_custom_call.1} parent=1 // pred_region
      %78 = dma.done [#allocation9], 2048
    $region41: #{tpu_custom_call.1} parent=1 // pred_fallthru
      _
    %v79 = vld [vmem:[#allocation2] sm:$0xff]
    %v80 = vld [vmem:[#allocation2 + $0x8] sm:$0xff]
    %v81 = vld [vmem:[#allocation2 + $0x10] sm:$0xff]
    %v82 = vld [vmem:[#allocation2 + $0x18] sm:$0xff]
    %v83 = vld [vmem:[#allocation5] sm:$0xff]
    %v84 = vld [vmem:[#allocation5 + $0x8] sm:$0xff]
    %v85 = vld [vmem:[#allocation5 + $0x10] sm:$0xff]
    %v86 = vld [vmem:[#allocation5 + $0x18] sm:$0xff]
    %v87 = vld [vmem:[#allocation5 + $0x20] sm:$0xff]
    %v88 = vld [vmem:[#allocation5 + $0x28] sm:$0xff]
    %v89 = vld [vmem:[#allocation5 + $0x30] sm:$0xff]
    %v90 = vld [vmem:[#allocation5 + $0x38] sm:$0xff]
    %v91 = vld [vmem:[#allocation5 + $0x40] sm:$0xff]
    %v92 = vld [vmem:[#allocation5 + $0x48] sm:$0xff]
    %v93 = vld [vmem:[#allocation5 + $0x50] sm:$0xff]
    %v94 = vld [vmem:[#allocation5 + $0x58] sm:$0xff]
    %v95 = vld [vmem:[#allocation5 + $0x60] sm:$0xff]
    %v96 = vld [vmem:[#allocation5 + $0x68] sm:$0xff]
    %v97 = vld [vmem:[#allocation5 + $0x70] sm:$0xff]
    %v98 = vld [vmem:[#allocation5 + $0x78] sm:$0xff]
    %99 = vmatprep.subr.mxu0 0.0
    %100 = vmatpush1.msra.mxu0 %v83
    %101 = vmatprep.subr.mxu0 0.0
    %102 = vmatpush1.msra.mxu0 %v84
    %103 = vmatprep.subr.mxu0 0.0
    %104 = vmatpush1.msra.mxu0 %v85
    %105 = vmatprep.subr.mxu0 0.0
    %106 = vmatpush1.msra.mxu0 %v86
    %107 = vmatprep.subr.mxu0 0.0
    %108 = vmatpush1.msra.mxu0 %v87
    %109 = vmatprep.subr.mxu0 0.0
    %110 = vmatpush1.msra.mxu0 %v88
    %111 = vmatprep.subr.mxu0 0.0
    %112 = vmatpush1.msra.mxu0 %v89
    %113 = vmatprep.subr.mxu0 0.0
    %114 = vmatpush1.msra.mxu0 %v90
    %115 = vmatprep.subr.mxu0 0.0
    %116 = vmatpush1.msra.mxu0 %v91
    %117 = vmatprep.subr.mxu0 0.0
    %118 = vmatpush1.msra.mxu0 %v92
    %119 = vmatprep.subr.mxu0 0.0
    %120 = vmatpush1.msra.mxu0 %v93
    %121 = vmatprep.subr.mxu0 0.0
    %122 = vmatpush1.msra.mxu0 %v94
    %123 = vmatprep.subr.mxu0 0.0
    %124 = vmatpush1.msra.mxu0 %v95
    %125 = vmatprep.subr.mxu0 0.0
    %126 = vmatpush1.msra.mxu0 %v96
    %127 = vmatprep.subr.mxu0 0.0
    %128 = vmatpush1.msra.mxu0 %v97
    %129 = vmatprep.subr.mxu0 0.0
    %130 = vmatpush1.msra.mxu0 %v98
    %131 = vmatprep.subr.mxu0 0.0
    %132 = vmatpush1.msra.mxu0 0.0
    %133 = vmatprep.subr.mxu0 0.0
    %134 = vmatpush1.msra.mxu0 0.0
    %135 = vmatprep.subr.mxu0 0.0
    %136 = vmatpush1.msra.mxu0 0.0
    %137 = vmatprep.subr.mxu0 0.0
    %138 = vmatpush1.msra.mxu0 0.0
    %139 = vmatprep.subr.mxu0 0.0
    %140 = vmatpush1.msra.mxu0 0.0
    %141 = vmatprep.subr.mxu0 0.0
    %142 = vmatpush1.msra.mxu0 0.0
    %143 = vmatprep.subr.mxu0 0.0
    %144 = vmatpush1.msra.mxu0 0.0
    %145 = vmatprep.subr.mxu0 0.0
    %146 = vmatpush1.msra.mxu0 0.0
    %147 = vmatprep.subr.mxu0 0.0
    %148 = vmatpush1.msra.mxu0 0.0
    %149 = vmatprep.subr.mxu0 0.0
    %150 = vmatpush1.msra.mxu0 0.0
    %151 = vmatprep.subr.mxu0 0.0
    %152 = vmatpush1.msra.mxu0 0.0
    %153 = vmatprep.subr.mxu0 0.0
    %154 = vmatpush1.msra.mxu0 0.0
    %155 = vmatprep.subr.mxu0 0.0
    %156 = vmatpush1.msra.mxu0 0.0
    %157 = vmatprep.subr.mxu0 0.0
    %158 = vmatpush1.msra.mxu0 0.0
    %159 = vmatprep.subr.mxu0 0.0
    %160 = vmatpush1.msra.mxu0 0.0
    %161 = vmatprep.subr.mxu0 0.0
    %162 = vmatpush1.msra.mxu0 0.0
    %163 = vmatprep.mubr.f32.mxu0 0.0
    %164 = vmatmul.mubr.f32.gmra.mrb[0].mxu0 %v79
    %v165 = vpop.f32.mrb[0].mxu0
    %v166 = vadd.f32 0.0, %v165
    %v167 = vpop.f32.mrb[0].mxu0
    %168 = vmatprep.mubr.f32.mxu0 0.0
    %169 = vmatmul.mubr.f32.gmra.mrb[0].mxu0 %v80
    %v170 = vpop.f32.mrb[0].mxu0
    %v171 = vadd.f32 0.0, %v170
    %v172 = vpop.f32.mrb[0].mxu0
    %173 = vmatprep.mubr.f32.mxu0 0.0
    %174 = vmatmul.mubr.f32.gmra.mrb[0].mxu0 %v81
    %v175 = vpop.f32.mrb[0].mxu0
    %v176 = vadd.f32 0.0, %v175
    %v177 = vpop.f32.mrb[0].mxu0
    %178 = vmatprep.mubr.f32.mxu0 0.0
    %179 = vmatmul.mubr.f32.gmra.mrb[0].mxu0 %v82
    %v180 = vpop.f32.mrb[0].mxu0
    %v181 = vadd.f32 0.0, %v180
    %v182 = vpop.f32.mrb[0].mxu0
    %183 = vdwg.mxu0
    %v184 = vld [vmem:[%s2] sm:$0x1]
    %v186 = vlaneseq
    %v187 = vshrl.u32 %v186, 7
    %v188 = vsub.s32 0, %v187
    %v189 = vrot.slane %v184, %v188
    %v191 = vadd.f32 %v166, %v189
    %v192 = vadd.f32 %v171, %v189
    %v193 = vadd.f32 %v176, %v189
    %v194 = vadd.f32 %v181, %v189
    %v195 = vmax.f32 %v191, 0.0
    %v196 = vmax.f32 %v192, 0.0
    %v197 = vmax.f32 %v193, 0.0
    %v198 = vmax.f32 %v194, 0.0
    %v199 = vld [vmem:[#allocation7] sm:$0xff]
    %v200 = vld [vmem:[#allocation7 + $0x8] sm:$0xff]
    %v201 = vmul.f32 %v195, %v199
    %v202 = vmul.f32 %v196, %v200
    %v203 = vmul.f32 %v197, %v199
    %v204 = vmul.f32 %v198, %v200
    %v205 = vmax.f32 %v201, %v202
    %v206 = vrot.slane %v205, 4
    %v207 = vmax.f32 %v205, %v206
    %v208 = vrot.slane %v207, 2
    %v209 = vmax.f32 %v207, %v208
    %v210 = vrot.slane %v209, 1
    %v211 = vmax.f32 %v209, %v210
    %v212 = vmax.f32 %v203, %v204
    %v213 = vrot.slane %v212, 4
    %v214 = vmax.f32 %v212, %v213
    %v215 = vrot.slane %v214, 2
    %v216 = vmax.f32 %v214, %v215
    %v217 = vrot.slane %v216, 1
    %v218 = vmax.f32 %v216, %v217
    %v219 = vld [vmem:[#allocation8] sm:$0xff]
    %v220 = vld [vmem:[#allocation8 + $0x8] sm:$0xff]
    %v221 = vld [vmem:[#allocation8 + $0x10] sm:$0xff]
    %v222 = vld [vmem:[#allocation8 + $0x18] sm:$0xff]
    %v223 = vld [vmem:[#allocation8 + $0x20] sm:$0xff]
    %v224 = vld [vmem:[#allocation8 + $0x28] sm:$0xff]
    %v225 = vld [vmem:[#allocation8 + $0x30] sm:$0xff]
    %v226 = vld [vmem:[#allocation8 + $0x38] sm:$0xff]
    %v227 = vld [vmem:[#allocation8 + $0x40] sm:$0xff]
    %v228 = vld [vmem:[#allocation8 + $0x48] sm:$0xff]
    %v229 = vld [vmem:[#allocation8 + $0x50] sm:$0xff]
    %v230 = vld [vmem:[#allocation8 + $0x58] sm:$0xff]
    %v231 = vld [vmem:[#allocation8 + $0x60] sm:$0xff]
    %v232 = vld [vmem:[#allocation8 + $0x68] sm:$0xff]
    %v233 = vld [vmem:[#allocation8 + $0x70] sm:$0xff]
    %v234 = vld [vmem:[#allocation8 + $0x78] sm:$0xff]
    %v235 = vld [vmem:[%s5] sm:$0x1]
    %v237 = vlaneseq
    %v238 = vshrl.u32 %v237, 7
    %v239 = vsub.s32 0, %v238
    %v240 = vrot.slane %v235, %v239
    %vm244 = vcmask 1041409
    %v245 = vsel %vm244, %v218, %v211
    %247 = vmatprep.subr.mxu0 0.0
    %248 = vmatpush1.msra.mxu0 %v219
    %249 = vmatprep.subr.mxu0 0.0
    %250 = vmatpush1.msra.mxu0 %v220
    %251 = vmatprep.subr.mxu0 0.0
    %252 = vmatpush1.msra.mxu0 %v221
    %253 = vmatprep.subr.mxu0 0.0
    %254 = vmatpush1.msra.mxu0 %v222
    %255 = vmatprep.subr.mxu0 0.0
    %256 = vmatpush1.msra.mxu0 %v223
    %257 = vmatprep.subr.mxu0 0.0
    %258 = vmatpush1.msra.mxu0 %v224
    %259 = vmatprep.subr.mxu0 0.0
    %260 = vmatpush1.msra.mxu0 %v225
    %261 = vmatprep.subr.mxu0 0.0
    %262 = vmatpush1.msra.mxu0 %v226
    %263 = vmatprep.subr.mxu0 0.0
    %264 = vmatpush1.msra.mxu0 %v227
    %265 = vmatprep.subr.mxu0 0.0
    %266 = vmatpush1.msra.mxu0 %v228
    %267 = vmatprep.subr.mxu0 0.0
    %268 = vmatpush1.msra.mxu0 %v229
    %269 = vmatprep.subr.mxu0 0.0
    %270 = vmatpush1.msra.mxu0 %v230
    %271 = vmatprep.subr.mxu0 0.0
    %272 = vmatpush1.msra.mxu0 %v231
    %273 = vmatprep.subr.mxu0 0.0
    %274 = vmatpush1.msra.mxu0 %v232
    %275 = vmatprep.subr.mxu0 0.0
    %276 = vmatpush1.msra.mxu0 %v233
    %277 = vmatprep.subr.mxu0 0.0
    %278 = vmatpush1.msra.mxu0 %v234
    %279 = vmatprep.subr.mxu0 0.0
    %280 = vmatpush1.msra.mxu0 0.0
    %281 = vmatprep.subr.mxu0 0.0
    %282 = vmatpush1.msra.mxu0 0.0
    %283 = vmatprep.subr.mxu0 0.0
    %284 = vmatpush1.msra.mxu0 0.0
    %285 = vmatprep.subr.mxu0 0.0
    %286 = vmatpush1.msra.mxu0 0.0
    %287 = vmatprep.subr.mxu0 0.0
    %288 = vmatpush1.msra.mxu0 0.0
    %289 = vmatprep.subr.mxu0 0.0
    %290 = vmatpush1.msra.mxu0 0.0
    %291 = vmatprep.subr.mxu0 0.0
    %292 = vmatpush1.msra.mxu0 0.0
    %293 = vmatprep.subr.mxu0 0.0
    %294 = vmatpush1.msra.mxu0 0.0
    %295 = vmatprep.subr.mxu0 0.0
    %296 = vmatpush1.msra.mxu0 0.0
    %297 = vmatprep.subr.mxu0 0.0
    %298 = vmatpush1.msra.mxu0 0.0
    %299 = vmatprep.subr.mxu0 0.0
    %300 = vmatpush1.msra.mxu0 0.0
    %301 = vmatprep.subr.mxu0 0.0
    %302 = vmatpush1.msra.mxu0 0.0
    %303 = vmatprep.subr.mxu0 0.0
    %304 = vmatpush1.msra.mxu0 0.0
    %305 = vmatprep.subr.mxu0 0.0
    %306 = vmatpush1.msra.mxu0 0.0
    %307 = vmatprep.subr.mxu0 0.0
    %308 = vmatpush1.msra.mxu0 0.0
    %309 = vmatprep.subr.mxu0 0.0
    %310 = vmatpush1.msra.mxu0 0.0
    %311 = vmatprep.mubr.f32.mxu0 0.0
    %312 = vmatmul.mubr.f32.gmra.mrb[0].mxu0 %v245
    %v313 = vpop.f32.mrb[0].mxu0
    %v314 = vadd.f32 %v240, %v313
    %v315 = vpop.f32.mrb[0].mxu0
    %316 = vdwg.mxu0
    %317 = vst [vmem:[#allocation10] sm:$0x3] %v314
    // Predicated region
    $region42: #{tpu_custom_call.1} parent=1 // pred_check
      _
    $region43: #{tpu_custom_call.1} parent=1 // pred_check_branch
      %319 = sbr.rel (0) target = $region45
    $region44: #{tpu_custom_call.1} parent=1 // pred_region
      %s321 = ssub.s32 32, 32
      %322 = vsyncadd [#allocation4], %s321
      %s324 = sshll.u32 [#allocation10], 4
      %s325 = int_to_ptr.vmem [resolvable:$true] %s324
      %327 = dma.vmem_to_hbm [thread:$0]  %s325, 32, %s6, [#allocation4]
    $region45: #{tpu_custom_call.1} parent=1 // pred_fallthru
      _
    // Predicated region
    $region46: #{tpu_custom_call.1} parent=1 // pred_check
      _
    $region47: #{tpu_custom_call.1} parent=1 // pred_check_branch
      %329 = sbr.rel (0) target = $region49
    $region48: #{tpu_custom_call.1} parent=1 // pred_region
      %330 = dma.done [#allocation4], 32
    $region49: #{tpu_custom_call.1} parent=1 // pred_fallthru
      _
    %331 = vsyncpa [#allocation3], 1
    %332 = vsyncpa [#allocation6], 1
    %333 = vsyncpa [#allocation9], 1
    %334 = vsyncpa [#allocation4], 1

</llo_original>
